<compile_context>
chip_gen: v5e
topology: v5e:2x2
jax: 0.10.0
libtpu: 0.0.40
codegen_flags: <defaults>
</compile_context>

<pallas_src>
import re

import jax
import jax.numpy as jnp
from jax.experimental import pallas as pl
from jax.experimental.pallas import tpu as pltpu

_MIB = 1024 * 1024


def _tpu_generation():
    """Best-effort TPU generation (e.g. 5, 6, 7). Returns 0 if unknown."""
    try:
        kind = jax.devices()[0].device_kind
    except Exception:
        return 0
    m = re.search(r"(\d+)", kind)
    return int(m.group(1)) if m else 0


def _chip_tuning(gen):
    """(target_block_bytes, vmem_limit_bytes) gated per TPU generation."""
    if gen >= 7:
        # v7x: 64 MiB VMEM per TensorCore -> keep >= 16 MiB headroom.
        return 4 * _MIB, 48 * _MIB
    if gen in (5, 6):
        # v5e/v6e: 128 MiB physical VMEM -> bigger blocks, fewer grid steps.
        return 8 * _MIB, 64 * _MIB
    # Unknown chip: conservative defaults.
    return 4 * _MIB, 32 * _MIB


def _compute_dtype(dtype, gen):
    # bf16 VPU/EUP exist on v6e/v7x; v5e (and unknown chips) upcast to f32.
    if dtype == jnp.bfloat16 and gen >= 6:
        return jnp.bfloat16
    return jnp.float32


def _make_swish_kernel(compute_dtype):
    def kernel(x_ref, o_ref):
        x = x_ref[...].astype(compute_dtype)
        # swish(x) = x * sigmoid(x) = 0.5 * x * (tanh(0.5 * x) + 1)
        # 1 EUP op (tanh) + 3 VALU ops per element.
        half_x = 0.5 * x
        y = half_x * (jnp.tanh(half_x) + 1.0)
        o_ref[...] = y.astype(o_ref.dtype)

    return kernel


def swish(x, *, target_block_bytes=None, vmem_limit_bytes=None, donate=False):
    """Elementwise x * sigmoid(x) (Swish / SiLU), matching torch Swish.forward."""
    orig_shape = x.shape
    dtype = x.dtype
    n = x.size
    if n == 0:
        return x

    itemsize = jnp.dtype(dtype).itemsize
    sublane = {4: 8, 2: 16, 1: 32}.get(itemsize, 8)  # dtype-aware min sublane tile
    lane = 128

    gen = _tpu_generation()
    default_block, default_vmem = _chip_tuning(gen)
    if target_block_bytes is None:
        target_block_bytes = default_block
    if vmem_limit_bytes is None:
        vmem_limit_bytes = default_vmem

    kernel = _make_swish_kernel(_compute_dtype(dtype, gen))
    compiler_params = pltpu.CompilerParams(
        dimension_semantics=("parallel",),        # independent tiles -> megacore-shardable
        vmem_limit_bytes=vmem_limit_bytes,
    )
    io_aliases = {0: 0} if donate else {}
    want_pipeline = n * itemsize > _MIB           # enforce >= ~8 grid steps above ~1 MiB

    # ---- fast path: lane-dense 2D slab via a metadata-only reshape ------------
    cols = 0
    for c in range(2048, lane - 1, -lane):        # 2048, 1920, ..., 128
        if n % c == 0:
            cols = c
            break

    if cols:
        rows = n // cols
        x2 = x.reshape(rows, cols)

        rows_per_block = max(sublane, target_block_bytes // (cols * itemsize))
        if rows <= sublane:
            tr = rows                             # tiny slab: one full-extent block
        else:
            tr = max(sublane, (min(rows_per_block, rows) // sublane) * sublane)
            if want_pipeline:
                # Never a single serialized DMA-in -> compute -> DMA-out step:
                # aim for >= ~8 steps so the pipeline overlaps and (on v7x) both
                # TensorCores get work from the "parallel" grid axis.
                cap = max(sublane, ((rows // 8) // sublane) * sublane)
                tr = min(tr, cap)
        grid = (pl.cdiv(rows, tr),)

        out = pl.pallas_call(
            kernel,
            out_shape=jax.ShapeDtypeStruct((rows, cols), dtype),
            grid_spec=pltpu.PrefetchScalarGridSpec(
                num_scalar_prefetch=0,
                grid=grid,
                in_specs=[pl.BlockSpec((tr, cols), lambda i: (i, 0))],
                out_specs=pl.BlockSpec((tr, cols), lambda i: (i, 0)),
            ),
            compiler_params=compiler_params,
            input_output_aliases=io_aliases,
        )(x2)
        return out.reshape(orig_shape)

    # ---- ragged fallback: flat 1-D view, ragged last block masked by Pallas ---
    # No extra HBM passes: Pallas read-pads the final partial block and masks
    # its store (garbage flowing through tanh is discarded by the masked store).
    x1 = x.reshape(-1)
    tile_unit = sublane * lane
    tile = max(tile_unit, (target_block_bytes // itemsize // tile_unit) * tile_unit)
    if want_pipeline:
        cap = max(tile_unit, ((n // 8) // tile_unit) * tile_unit)
        tile = min(tile, cap)
    grid = (pl.cdiv(n, tile),)

    out = pl.pallas_call(
        kernel,
        out_shape=jax.ShapeDtypeStruct((n,), dtype),
        grid_spec=pltpu.PrefetchScalarGridSpec(
            num_scalar_prefetch=0,
            grid=grid,
            in_specs=[pl.BlockSpec((tile,), lambda i: (i,))],
            out_specs=pl.BlockSpec((tile,), lambda i: (i,)),
        ),
        compiler_params=compiler_params,
        input_output_aliases=io_aliases,
    )(x1)
    return out.reshape(orig_shape)


if __name__ == "__main__":
    key = jax.random.PRNGKey(0)
    # NCHW conv-activation-like input: batch=2, channels=4, spatial=16x16.
    x = jax.random.normal(key, (2, 4, 16, 16), dtype=jnp.float32)

    y = jax.block_until_ready(swish(x))

    ref = x * jax.nn.sigmoid(x)
    assert y.shape == x.shape and y.dtype == x.dtype
    assert jnp.allclose(y, ref, atol=1e-5, rtol=1e-5), float(jnp.max(jnp.abs(y - ref)))

    print("KERNEL_OK")
</pallas_src>

<mosaic_0001>
module attributes {stable_mosaic.version = 11 : i64} {
  func.func @kernel(%arg0: i32, %arg1: memref<1x2048xf32, #tpu.memory_space<vmem>>, %arg2: memref<1x2048xf32, #tpu.memory_space<vmem>>) attributes {dimension_semantics = [#tpu.dimension_semantics<parallel>], iteration_bounds = array<i64: 1>, scalar_prefetch = 0 : i64, scratch_operands = 0 : i64, tpu.core_type = #tpu.core_type<tc>, window_params = [{transform_indices = @transform_0, window_bounds = array<i64: 1, 2048>}, {transform_indices = @transform_1, window_bounds = array<i64: 1, 2048>}]} {
    %c0 = arith.constant 0 : index
    %c0_0 = arith.constant 0 : index
    %0 = vector.load %arg1[%c0, %c0_0] : memref<1x2048xf32, #tpu.memory_space<vmem>>, vector<1x2048xf32>
    %cst = arith.constant 5.000000e-01 : f32
    %1 = vector.broadcast %cst : f32 to vector<1x2048xf32>
    %2 = arith.mulf %1, %0 : vector<1x2048xf32>
    %3 = math.tanh %2 : vector<1x2048xf32>
    %cst_1 = arith.constant 1.000000e+00 : f32
    %4 = vector.broadcast %cst_1 : f32 to vector<1x2048xf32>
    %5 = arith.addf %3, %4 : vector<1x2048xf32>
    %6 = arith.mulf %2, %5 : vector<1x2048xf32>
    %c0_2 = arith.constant 0 : index
    %c0_3 = arith.constant 0 : index
    %7 = vector.load %arg2[%c0_2, %c0_3] : memref<1x2048xf32, #tpu.memory_space<vmem>>, vector<1x2048xf32>
    tpu.vector_store %arg2[%c0_2, %c0_3], %6 {strides = array<i32>} : memref<1x2048xf32, #tpu.memory_space<vmem>>, vector<1x2048xf32>,
    return
  }
  func.func @transform_0(%arg0: i32) -> (i32, i32) {
    %c0_i32 = arith.constant 0 : i32
    %c0_i32_0 = arith.constant 0 : i32
    return %arg0, %c0_i32 : i32, i32
  }
  func.func @transform_1(%arg0: i32) -> (i32, i32) {
    %c0_i32 = arith.constant 0 : i32
    %c0_i32_0 = arith.constant 0 : i32
    return %arg0, %c0_i32 : i32, i32
  }
}

</mosaic_0001>

<llo_original>
// kernel: tpu_custom_call.1
$region0: #{tpu_custom_call.1}
  #allocation0 [shape = 'u32[]', space=smem, size = 0x4, offset = 0x4, fixed_abs, tag = 'smem constant byte address 0x4 - core index']
  #allocation1 [shape = 'u32[72,128]{1,0:T(1,128)}', space=vmem, size = 0x9000, scoped, tag = 'internal scratch']
  %s0 = inlined_call_operand.hbm [shape: f32[1,2048], index: 0, kind: input, shape index: {}]
  %s1 = inlined_call_operand.hbm [shape: f32[1,2048], index: 1, kind: output, shape index: {}]
  %s2 = sld [smem:[#allocation0]]
  $region18: #{tpu_custom_call.1} parent=0
    _
  %s4 = ssub.s32 1, %s2
  %s5 = scalar_select 0, %s4, %s2
  $region1: #{tpu_custom_call.1} parent=0
    #allocation2 [shape = 'u8[8192]{0}', space=vmem, size = 0x2000, scoped, tag = 'input window, operand 0, single buffered']
    #allocation3 [shape = 's32[1]{0}', space=sflag, size = 0x4, scoped, tag = 'scoped memory for tpu_custom_call.1']
    #allocation4 [shape = 's32[1]{0}', space=sflag, size = 0x4, scoped, tag = 'scoped memory for tpu_custom_call.1']
    #allocation5 [shape = 'u8[8192]{0}', space=vmem, size = 0x2000, scoped, tag = 'output window, operand 0, single buffered']
    %6 = vsyncpa [#allocation3], 0
    %7 = vsyncpa [#allocation4], 0
    // Predicated region
    $region2: #{tpu_custom_call.1} parent=1 // pred_check
      _
    $region3: #{tpu_custom_call.1} parent=1 // pred_check_branch
      %9 = sbr.rel (0) target = $region5
    $region4: #{tpu_custom_call.1} parent=1 // pred_region
      %11 = vsyncadd [#allocation3], 0
      %s13 = sshll.u32 %s0, 4
      %s14 = int_to_ptr.hbm [resolvable:$true] %s13
      %s15 = sshll.u32 [#allocation2], 4
      %s16 = int_to_ptr.vmem [resolvable:$true] %s15
      %18 = dma.hbm_to_vmem [thread:$0]  %s14, 256, %s16, [#allocation3]
    $region5: #{tpu_custom_call.1} parent=1 // pred_fallthru
      _
    // Predicated region
    $region6: #{tpu_custom_call.1} parent=1 // pred_check
      _
    $region7: #{tpu_custom_call.1} parent=1 // pred_check_branch
      %20 = sbr.rel (0) target = $region9
    $region8: #{tpu_custom_call.1} parent=1 // pred_region
      %22 = dma.done [#allocation3], 256
    $region9: #{tpu_custom_call.1} parent=1 // pred_fallthru
      _
    %v23 = vld [vmem:[#allocation2] sm:$0xff]
    %v24 = vld [vmem:[#allocation2 + $0x8] sm:$0xff]
    %v25 = vmul.f32 %v23, 0.5
    %v26 = vmul.f32 %v24, 0.5
    %v27 = vtanh.pop %v25
    %v28 = vtanh.pop %v26
    %v29 = vadd.f32 %v27, 1.0
    %v30 = vadd.f32 %v28, 1.0
    %v31 = vmul.f32 %v25, %v29
    %v32 = vmul.f32 %v26, %v30
    %33 = vst [vmem:[#allocation5] sm:$0xff] %v31
    %34 = vst [vmem:[#allocation5 + $0x8] sm:$0xff] %v32
    // Predicated region
    $region10: #{tpu_custom_call.1} parent=1 // pred_check
      _
    $region11: #{tpu_custom_call.1} parent=1 // pred_check_branch
      %36 = sbr.rel (0) target = $region13
    $region12: #{tpu_custom_call.1} parent=1 // pred_region
      %38 = vsyncadd [#allocation4], 0
      %s40 = sshll.u32 [#allocation5], 4
      %s41 = int_to_ptr.vmem [resolvable:$true] %s40
      %s42 = sshll.u32 %s1, 4
      %s43 = int_to_ptr.hbm [resolvable:$true] %s42
      %45 = dma.vmem_to_hbm [thread:$0]  %s41, 256, %s43, [#allocation4]
    $region13: #{tpu_custom_call.1} parent=1 // pred_fallthru
      _
    // Predicated region
    $region14: #{tpu_custom_call.1} parent=1 // pred_check
      _
    $region15: #{tpu_custom_call.1} parent=1 // pred_check_branch
      %47 = sbr.rel (0) target = $region17
    $region16: #{tpu_custom_call.1} parent=1 // pred_region
      %49 = dma.done [#allocation4], 256
    $region17: #{tpu_custom_call.1} parent=1 // pred_fallthru
      _
    %50 = vsyncpa [#allocation3], 1
    %51 = vsyncpa [#allocation4], 1

</llo_original>
